<compile_context>
chip_gen: v7x
topology: tpu7x:2x2x1
jax: 0.10.0
libtpu: 0.0.40
codegen_flags: <defaults>
</compile_context>

<pallas_src>
import functools
import math

import jax
import jax.numpy as jnp
from jax.experimental import pallas as pl
from jax.experimental.pallas import tpu as pltpu

HIDDEN = 256        # nn.Linear(input_size, 256) / nn.Linear(latent, 256)
LN_EPS = 1e-12      # module explicitly uses nn.LayerNorm(256, eps=1e-12)


def _round_up(n, m):
    return ((n + m - 1) // m) * m


def _prelu(x, a):
    # nn.PReLU with a single shared scalar parameter a
    return jnp.maximum(x, 0.0) + a * jnp.minimum(x, 0.0)


def _layernorm(x, gamma, beta):
    # nn.LayerNorm over last dim, biased variance, elementwise affine
    mean = jnp.mean(x, axis=-1, keepdims=True)
    xc = x - mean
    var = jnp.mean(xc * xc, axis=-1, keepdims=True)
    return xc * jax.lax.rsqrt(var + LN_EPS) * gamma + beta


def vae_kernel(scal_ref, x_ref, eps_ref, w1_ref, wenc_ref, w3_ref, w4_ref,
               vec_ref, out_ref, *, mm_dtype):
    f32 = jnp.float32
    D = x_ref.shape[-1]          # input_size
    L = eps_ref.shape[-1]        # latent_size
    H = w1_ref.shape[-1]         # 256

    def mm(a, b):
        # MXU matmul; mm_dtype=bf16 halves weight bytes / doubles throughput on v6e/v7x,
        # accumulation stays f32 either way.
        return jnp.dot(a.astype(mm_dtype), b.astype(mm_dtype),
                       preferred_element_type=f32)

    # ---- unpack the single packed-parameter slab (rows padded to lane width) ----
    b1, g1, be1 = vec_ref[0:1, :H], vec_ref[1:2, :H], vec_ref[2:3, :H]
    b3, g2, be2 = vec_ref[3:4, :H], vec_ref[4:5, :H], vec_ref[5:6, :H]
    b_enc = vec_ref[6:7, :2 * L]
    b4 = vec_ref[7:8, :D]
    a1 = scal_ref[0]             # PReLU1 weight (SMEM scalar)
    a2 = scal_ref[1]             # PReLU2 weight (SMEM scalar)

    x = x_ref[...].astype(f32)

    # ---- encode ----
    h1 = _layernorm(_prelu(mm(x, w1_ref[...]) + b1, a1), g1, be1)
    enc = mm(h1, wenc_ref[...]) + b_enc          # fused fc21 | fc22
    mu = enc[:, :L]
    logvar = enc[:, L:]

    # ---- reparameterize (eps ~ N(0,1) supplied from the wrapper) ----
    z = mu + eps_ref[...].astype(f32) * jnp.exp(0.5 * logvar)

    # ---- decode ----
    h3 = _layernorm(_prelu(mm(z, w3_ref[...]) + b3, a2), g2, be2)
    recon = mm(h3, w4_ref[...]) + b4

    # ---- single packed, lane-dense output: [recon | mu | logvar | zero pad] ----
    out_ref[...] = jnp.zeros_like(out_ref)                 # deterministic padding lanes
    out_ref[:, :D] = recon.astype(out_ref.dtype)
    out_ref[:, D:D + L] = mu.astype(out_ref.dtype)
    out_ref[:, D + L:D + 2 * L] = logvar.astype(out_ref.dtype)


def vae_forward(x, params, eps, *, matmul_dtype=jnp.float32, batch_tile=None):
    B, D = x.shape
    L = eps.shape[1]
    H = HIDDEN

    # Fuse fc21/fc22 into one [H, 2L] projection.
    w_enc = jnp.concatenate([params["w21"], params["w22"]], axis=1)
    b_enc = jnp.concatenate([params["b21"], params["b22"]], axis=1)

    # Pack every tiny per-feature vector into a single (8, W) slab -> one input DMA.
    W = _round_up(max(H, 2 * L, D), 128)

    def row(v):
        v = v.reshape(1, -1).astype(jnp.float32)
        return jnp.pad(v, ((0, 0), (0, W - v.shape[1])))

    vecs = jnp.concatenate(
        [row(params["b1"]), row(params["g1"]), row(params["be1"]),
         row(params["b3"]), row(params["g2"]), row(params["be2"]),
         row(b_enc), row(params["b4"])], axis=0)              # (8, W)

    # PReLU scalars go to SMEM.
    scalars = jnp.stack([params["a1"].reshape(()).astype(jnp.float32),
                         params["a2"].reshape(()).astype(jnp.float32)])  # (2,)

    # Batch tiling: one block for small B; a "parallel" batch grid lets the two
    # TensorCores on v7x each take half the rows when B grows.
    tb = batch_tile if batch_tile is not None else min(B, 256)
    if B % tb != 0:
        tb = B
    grid = (B // tb,)

    Wout = _round_up(D + 2 * L, 128)     # lane-dense packed output width

    kernel = functools.partial(vae_kernel, mm_dtype=matmul_dtype)

    flops = 2 * B * (D * H + H * 2 * L + L * H + H * D)
    bytes_accessed = sum(int(a.size) * a.dtype.itemsize for a in
                         (x, eps, params["w1"], w_enc, params["w3"],
                          params["w4"], vecs)) + B * Wout * 4
    cost = pl.CostEstimate(flops=flops,
                           transcendentals=B * (L + 2),
                           bytes_accessed=bytes_accessed)

    packed = pl.pallas_call(
        kernel,
        out_shape=jax.ShapeDtypeStruct((B, Wout), jnp.float32),
        grid=grid,
        in_specs=[
            pl.BlockSpec(memory_space=pltpu.MemorySpace.SMEM),   # [a1, a2]
            pl.BlockSpec((tb, D), lambda i: (i, 0)),             # x
            pl.BlockSpec((tb, L), lambda i: (i, 0)),             # eps
            pl.BlockSpec((D, H), lambda i: (0, 0)),              # w1
            pl.BlockSpec((H, 2 * L), lambda i: (0, 0)),          # w21|w22 fused
            pl.BlockSpec((L, H), lambda i: (0, 0)),              # w3
            pl.BlockSpec((H, D), lambda i: (0, 0)),              # w4
            pl.BlockSpec((8, W), lambda i: (0, 0)),              # packed vectors
        ],
        out_specs=pl.BlockSpec((tb, Wout), lambda i: (i, 0)),
        compiler_params=pltpu.CompilerParams(
            dimension_semantics=("parallel",)),
        cost_estimate=cost,
    )(scalars, x, eps, params["w1"], w_enc, params["w3"], params["w4"], vecs)

    recon = packed[:, :D]
    mu = packed[:, D:D + L]
    logvar = packed[:, D + L:D + 2 * L]
    return recon, mu, logvar
    # TODO(synk): for production input_size (w1/w4 no longer VMEM-resident on v7x's
    # 64 MiB), add a K/N reduction grid axis for fc1/fc4 with a pl.when accumulator.


def xavier_normal(key, fan_in, fan_out):
    # matches nn.init.xavier_normal_ on an [out, in] weight; built directly as [in, out]
    std = math.sqrt(2.0 / (fan_in + fan_out))
    return std * jax.random.normal(key, (fan_in, fan_out), dtype=jnp.float32)


def init_params(key, input_size, latent_size):
    ks = jax.random.split(key, 5)
    p = {}
    p["w1"] = xavier_normal(ks[0], input_size, HIDDEN)          # fc1
    p["b1"] = jnp.zeros((1, HIDDEN), jnp.float32)
    p["a1"] = jnp.full((1, 1), 0.25, jnp.float32)               # prelu1 (default 0.25)
    p["g1"] = jnp.ones((1, HIDDEN), jnp.float32)                # norm1
    p["be1"] = jnp.zeros((1, HIDDEN), jnp.float32)
    p["w21"] = xavier_normal(ks[1], HIDDEN, latent_size)        # fc21
    p["b21"] = jnp.zeros((1, latent_size), jnp.float32)
    p["w22"] = xavier_normal(ks[2], HIDDEN, latent_size)        # fc22
    p["b22"] = jnp.zeros((1, latent_size), jnp.float32)
    p["w3"] = xavier_normal(ks[3], latent_size, HIDDEN)         # fc3
    p["b3"] = jnp.zeros((1, HIDDEN), jnp.float32)
    p["a2"] = jnp.full((1, 1), 0.25, jnp.float32)               # prelu2
    p["g2"] = jnp.ones((1, HIDDEN), jnp.float32)                # norm2
    p["be2"] = jnp.zeros((1, HIDDEN), jnp.float32)
    p["w4"] = xavier_normal(ks[4], HIDDEN, input_size)          # fc4
    p["b4"] = jnp.zeros((1, input_size), jnp.float32)
    # NOTE: prelu3 exists in the PyTorch module but is never used in forward().
    return p


if __name__ == "__main__":
    BATCH = 8
    INPUT_SIZE = 32     # inference_info['input_size'] (synthetic small value)
    LATENT_SIZE = 16    # inference_info['latent_size'] (synthetic small value)

    root = jax.random.PRNGKey(0)
    k_x, k_p, k_eps = jax.random.split(root, 3)

    x = jax.random.normal(k_x, (BATCH, INPUT_SIZE), dtype=jnp.float32)
    params = init_params(k_p, INPUT_SIZE, LATENT_SIZE)
    # eps ~ N(0,1) for reparameterization (torch.randn_like equivalent), generated
    # deterministically outside the kernel.
    eps = jax.random.normal(k_eps, (BATCH, LATENT_SIZE), dtype=jnp.float32)

    recon, mu, logvar = vae_forward(x, params, eps)
    jax.block_until_ready((recon, mu, logvar))

    # Pure-JAX reference of the same math (uses the unfused weights).
    def ref(x, p, eps):
        def ln(h, g, b):
            m = jnp.mean(h, -1, keepdims=True)
            v = jnp.mean((h - m) ** 2, -1, keepdims=True)
            return (h - m) / jnp.sqrt(v + LN_EPS) * g + b

        def prelu(h, a):
            return jnp.maximum(h, 0) + a * jnp.minimum(h, 0)

        h1 = ln(prelu(x @ p["w1"] + p["b1"], p["a1"][0, 0]), p["g1"], p["be1"])
        mu = h1 @ p["w21"] + p["b21"]
        lv = h1 @ p["w22"] + p["b22"]
        z = mu + eps * jnp.exp(0.5 * lv)
        h3 = ln(prelu(z @ p["w3"] + p["b3"], p["a2"][0, 0]), p["g2"], p["be2"])
        return h3 @ p["w4"] + p["b4"], mu, lv

    r_ref, mu_ref, lv_ref = ref(x, params, eps)
    assert jnp.allclose(recon, r_ref, atol=1e-4, rtol=1e-4)
    assert jnp.allclose(mu, mu_ref, atol=1e-4, rtol=1e-4)
    assert jnp.allclose(logvar, lv_ref, atol=1e-4, rtol=1e-4)

    print("KERNEL_OK")
</pallas_src>

<mosaic_0001>
module attributes {stable_mosaic.version = 11 : i64} {
  func.func @vae_kernel(%arg0: i32, %arg1: memref<2xf32, #tpu.memory_space<smem>>, %arg2: memref<8x32xf32, #tpu.memory_space<vmem>>, %arg3: memref<8x16xf32, #tpu.memory_space<vmem>>, %arg4: memref<32x256xf32, #tpu.memory_space<vmem>>, %arg5: memref<256x32xf32, #tpu.memory_space<vmem>>, %arg6: memref<16x256xf32, #tpu.memory_space<vmem>>, %arg7: memref<256x32xf32, #tpu.memory_space<vmem>>, %arg8: memref<8x256xf32, #tpu.memory_space<vmem>>, %arg9: memref<8x128xf32, #tpu.memory_space<vmem>>) attributes {dimension_semantics = [#tpu.dimension_semantics<parallel>], iteration_bounds = array<i64: 1>, scalar_prefetch = 0 : i64, scratch_operands = 0 : i64, tpu.core_type = #tpu.core_type<tc>, window_params = [{transform_indices = @transform_0, window_bounds = array<i64: 2>}, {transform_indices = @transform_1, window_bounds = array<i64: 8, 32>}, {transform_indices = @transform_2, window_bounds = array<i64: 8, 16>}, {pipeline_mode = #tpu.pipeline_mode<synchronous>, transform_indices = @transform_3, window_bounds = array<i64: 32, 256>}, {pipeline_mode = #tpu.pipeline_mode<synchronous>, transform_indices = @transform_4, window_bounds = array<i64: 256, 32>}, {pipeline_mode = #tpu.pipeline_mode<synchronous>, transform_indices = @transform_5, window_bounds = array<i64: 16, 256>}, {pipeline_mode = #tpu.pipeline_mode<synchronous>, transform_indices = @transform_6, window_bounds = array<i64: 256, 32>}, {pipeline_mode = #tpu.pipeline_mode<synchronous>, transform_indices = @transform_7, window_bounds = array<i64: 8, 256>}, {transform_indices = @transform_8, window_bounds = array<i64: 8, 128>}]} {
    %c0 = arith.constant 0 : index
    %c0_0 = arith.constant 0 : index
    %0 = vector.load %arg8[%c0, %c0_0] : memref<8x256xf32, #tpu.memory_space<vmem>>, vector<1x256xf32>
    %c1 = arith.constant 1 : index
    %c0_1 = arith.constant 0 : index
    %1 = vector.load %arg8[%c1, %c0_1] : memref<8x256xf32, #tpu.memory_space<vmem>>, vector<1x256xf32>
    %c2 = arith.constant 2 : index
    %c0_2 = arith.constant 0 : index
    %2 = vector.load %arg8[%c2, %c0_2] : memref<8x256xf32, #tpu.memory_space<vmem>>, vector<1x256xf32>
    %c3 = arith.constant 3 : index
    %c0_3 = arith.constant 0 : index
    %3 = vector.load %arg8[%c3, %c0_3] : memref<8x256xf32, #tpu.memory_space<vmem>>, vector<1x256xf32>
    %c4 = arith.constant 4 : index
    %c0_4 = arith.constant 0 : index
    %4 = vector.load %arg8[%c4, %c0_4] : memref<8x256xf32, #tpu.memory_space<vmem>>, vector<1x256xf32>
    %c5 = arith.constant 5 : index
    %c0_5 = arith.constant 0 : index
    %5 = vector.load %arg8[%c5, %c0_5] : memref<8x256xf32, #tpu.memory_space<vmem>>, vector<1x256xf32>
    %c6 = arith.constant 6 : index
    %c0_6 = arith.constant 0 : index
    %6 = vector.load %arg8[%c6, %c0_6] : memref<8x256xf32, #tpu.memory_space<vmem>>, vector<1x32xf32>
    %c7 = arith.constant 7 : index
    %c0_7 = arith.constant 0 : index
    %7 = vector.load %arg8[%c7, %c0_7] : memref<8x256xf32, #tpu.memory_space<vmem>>, vector<1x32xf32>
    %c0_8 = arith.constant 0 : index
    %8 = memref.load %arg1[%c0_8] : memref<2xf32, #tpu.memory_space<smem>>
    %c1_9 = arith.constant 1 : index
    %9 = memref.load %arg1[%c1_9] : memref<2xf32, #tpu.memory_space<smem>>
    %c0_10 = arith.constant 0 : index
    %c0_11 = arith.constant 0 : index
    %10 = vector.load %arg2[%c0_10, %c0_11] : memref<8x32xf32, #tpu.memory_space<vmem>>, vector<8x32xf32>
    %c0_12 = arith.constant 0 : index
    %c0_13 = arith.constant 0 : index
    %11 = vector.load %arg4[%c0_12, %c0_13] : memref<32x256xf32, #tpu.memory_space<vmem>>, vector<32x256xf32>
    %cst = arith.constant dense<0.000000e+00> : vector<8x256xf32>
    %12 = tpu.matmul %10, %11, %cst {dimension_numbers = #tpu.dot_dimension_numbers<[1], [0], [0], [1], [0, 0, 1, 1], [], []>} : vector<8x32xf32>, vector<32x256xf32>, vector<8x256xf32> -> vector<8x256xf32>
    %13 = vector.broadcast %0 : vector<1x256xf32> to vector<8x256xf32>
    %14 = arith.addf %12, %13 : vector<8x256xf32>
    %cst_14 = arith.constant 0.000000e+00 : f32
    %15 = vector.broadcast %cst_14 : f32 to vector<8x256xf32>
    %16 = arith.maximumf %14, %15 : vector<8x256xf32>
    %cst_15 = arith.constant 0.000000e+00 : f32
    %17 = vector.broadcast %cst_15 : f32 to vector<8x256xf32>
    %18 = arith.minimumf %14, %17 : vector<8x256xf32>
    %19 = vector.broadcast %8 : f32 to vector<8x256xf32>
    %20 = arith.mulf %19, %18 : vector<8x256xf32>
    %21 = arith.addf %16, %20 : vector<8x256xf32>
    %cst_16 = arith.constant dense<0.000000e+00> : vector<8xf32>
    %22 = vector.multi_reduction <add>, %21, %cst_16 [1] : vector<8x256xf32> to vector<8xf32>
    %23 = vector.shape_cast %22 : vector<8xf32> to vector<8x1xf32>
    %cst_17 = arith.constant 2.560000e+02 : f32
    %24 = vector.broadcast %cst_17 : f32 to vector<8x1xf32>
    %25 = arith.divf %23, %24 : vector<8x1xf32>
    %26 = vector.broadcast %25 : vector<8x1xf32> to vector<8x256xf32>
    %27 = arith.subf %21, %26 : vector<8x256xf32>
    %28 = arith.mulf %27, %27 : vector<8x256xf32>
    %cst_18 = arith.constant dense<0.000000e+00> : vector<8xf32>
    %29 = vector.multi_reduction <add>, %28, %cst_18 [1] : vector<8x256xf32> to vector<8xf32>
    %30 = vector.shape_cast %29 : vector<8xf32> to vector<8x1xf32>
    %cst_19 = arith.constant 2.560000e+02 : f32
    %31 = vector.broadcast %cst_19 : f32 to vector<8x1xf32>
    %32 = arith.divf %30, %31 : vector<8x1xf32>
    %cst_20 = arith.constant 9.99999996E-13 : f32
    %33 = vector.broadcast %cst_20 : f32 to vector<8x1xf32>
    %34 = arith.addf %32, %33 : vector<8x1xf32>
    %35 = math.rsqrt %34 : vector<8x1xf32>
    %36 = vector.broadcast %35 : vector<8x1xf32> to vector<8x256xf32>
    %37 = arith.mulf %27, %36 : vector<8x256xf32>
    %38 = vector.broadcast %1 : vector<1x256xf32> to vector<8x256xf32>
    %39 = arith.mulf %37, %38 : vector<8x256xf32>
    %40 = vector.broadcast %2 : vector<1x256xf32> to vector<8x256xf32>
    %41 = arith.addf %39, %40 : vector<8x256xf32>
    %c0_21 = arith.constant 0 : index
    %c0_22 = arith.constant 0 : index
    %42 = vector.load %arg5[%c0_21, %c0_22] : memref<256x32xf32, #tpu.memory_space<vmem>>, vector<256x32xf32>
    %cst_23 = arith.constant dense<0.000000e+00> : vector<8x32xf32>
    %43 = tpu.matmul %41, %42, %cst_23 {dimension_numbers = #tpu.dot_dimension_numbers<[1], [0], [0], [1], [0, 0, 1, 1], [], []>} : vector<8x256xf32>, vector<256x32xf32>, vector<8x32xf32> -> vector<8x32xf32>
    %44 = vector.broadcast %6 : vector<1x32xf32> to vector<8x32xf32>
    %45 = arith.addf %43, %44 : vector<8x32xf32>
    %46 = vector.extract_strided_slice %45 {offsets = [0, 0], sizes = [8, 16], strides = [1, 1]} : vector<8x32xf32> to vector<8x16xf32>
    %47 = vector.extract_strided_slice %45 {offsets = [0, 16], sizes = [8, 16], strides = [1, 1]} : vector<8x32xf32> to vector<8x16xf32>
    %c0_24 = arith.constant 0 : index
    %c0_25 = arith.constant 0 : index
    %48 = vector.load %arg3[%c0_24, %c0_25] : memref<8x16xf32, #tpu.memory_space<vmem>>, vector<8x16xf32>
    %cst_26 = arith.constant 5.000000e-01 : f32
    %49 = vector.broadcast %cst_26 : f32 to vector<8x16xf32>
    %50 = arith.mulf %49, %47 : vector<8x16xf32>
    %51 = math.exp %50 : vector<8x16xf32>
    %52 = arith.mulf %48, %51 : vector<8x16xf32>
    %53 = arith.addf %46, %52 : vector<8x16xf32>
    %c0_27 = arith.constant 0 : index
    %c0_28 = arith.constant 0 : index
    %54 = vector.load %arg6[%c0_27, %c0_28] : memref<16x256xf32, #tpu.memory_space<vmem>>, vector<16x256xf32>
    %cst_29 = arith.constant dense<0.000000e+00> : vector<8x256xf32>
    %55 = tpu.matmul %53, %54, %cst_29 {dimension_numbers = #tpu.dot_dimension_numbers<[1], [0], [0], [1], [0, 0, 1, 1], [], []>} : vector<8x16xf32>, vector<16x256xf32>, vector<8x256xf32> -> vector<8x256xf32>
    %56 = vector.broadcast %3 : vector<1x256xf32> to vector<8x256xf32>
    %57 = arith.addf %55, %56 : vector<8x256xf32>
    %cst_30 = arith.constant 0.000000e+00 : f32
    %58 = vector.broadcast %cst_30 : f32 to vector<8x256xf32>
    %59 = arith.maximumf %57, %58 : vector<8x256xf32>
    %cst_31 = arith.constant 0.000000e+00 : f32
    %60 = vector.broadcast %cst_31 : f32 to vector<8x256xf32>
    %61 = arith.minimumf %57, %60 : vector<8x256xf32>
    %62 = vector.broadcast %9 : f32 to vector<8x256xf32>
    %63 = arith.mulf %62, %61 : vector<8x256xf32>
    %64 = arith.addf %59, %63 : vector<8x256xf32>
    %cst_32 = arith.constant dense<0.000000e+00> : vector<8xf32>
    %65 = vector.multi_reduction <add>, %64, %cst_32 [1] : vector<8x256xf32> to vector<8xf32>
    %66 = vector.shape_cast %65 : vector<8xf32> to vector<8x1xf32>
    %cst_33 = arith.constant 2.560000e+02 : f32
    %67 = vector.broadcast %cst_33 : f32 to vector<8x1xf32>
    %68 = arith.divf %66, %67 : vector<8x1xf32>
    %69 = vector.broadcast %68 : vector<8x1xf32> to vector<8x256xf32>
    %70 = arith.subf %64, %69 : vector<8x256xf32>
    %71 = arith.mulf %70, %70 : vector<8x256xf32>
    %cst_34 = arith.constant dense<0.000000e+00> : vector<8xf32>
    %72 = vector.multi_reduction <add>, %71, %cst_34 [1] : vector<8x256xf32> to vector<8xf32>
    %73 = vector.shape_cast %72 : vector<8xf32> to vector<8x1xf32>
    %cst_35 = arith.constant 2.560000e+02 : f32
    %74 = vector.broadcast %cst_35 : f32 to vector<8x1xf32>
    %75 = arith.divf %73, %74 : vector<8x1xf32>
    %cst_36 = arith.constant 9.99999996E-13 : f32
    %76 = vector.broadcast %cst_36 : f32 to vector<8x1xf32>
    %77 = arith.addf %75, %76 : vector<8x1xf32>
    %78 = math.rsqrt %77 : vector<8x1xf32>
    %79 = vector.broadcast %78 : vector<8x1xf32> to vector<8x256xf32>
    %80 = arith.mulf %70, %79 : vector<8x256xf32>
    %81 = vector.broadcast %4 : vector<1x256xf32> to vector<8x256xf32>
    %82 = arith.mulf %80, %81 : vector<8x256xf32>
    %83 = vector.broadcast %5 : vector<1x256xf32> to vector<8x256xf32>
    %84 = arith.addf %82, %83 : vector<8x256xf32>
    %c0_37 = arith.constant 0 : index
    %c0_38 = arith.constant 0 : index
    %85 = vector.load %arg7[%c0_37, %c0_38] : memref<256x32xf32, #tpu.memory_space<vmem>>, vector<256x32xf32>
    %cst_39 = arith.constant dense<0.000000e+00> : vector<8x32xf32>
    %86 = tpu.matmul %84, %85, %cst_39 {dimension_numbers = #tpu.dot_dimension_numbers<[1], [0], [0], [1], [0, 0, 1, 1], [], []>} : vector<8x256xf32>, vector<256x32xf32>, vector<8x32xf32> -> vector<8x32xf32>
    %87 = vector.broadcast %7 : vector<1x32xf32> to vector<8x32xf32>
    %88 = arith.addf %86, %87 : vector<8x32xf32>
    %cst_40 = arith.constant 0.000000e+00 : f32
    %89 = vector.broadcast %cst_40 : f32 to vector<8x128xf32>
    %c0_41 = arith.constant 0 : index
    %c0_42 = arith.constant 0 : index
    %90 = vector.load %arg9[%c0_41, %c0_42] : memref<8x128xf32, #tpu.memory_space<vmem>>, vector<8x128xf32>
    tpu.vector_store %arg9[%c0_41, %c0_42], %89 {strides = array<i32>} : memref<8x128xf32, #tpu.memory_space<vmem>>, vector<8x128xf32>,
    %c0_43 = arith.constant 0 : index
    %c0_44 = arith.constant 0 : index
    %91 = vector.load %arg9[%c0_43, %c0_44] : memref<8x128xf32, #tpu.memory_space<vmem>>, vector<8x32xf32>
    tpu.vector_store %arg9[%c0_43, %c0_44], %88 {strides = array<i32>} : memref<8x128xf32, #tpu.memory_space<vmem>>, vector<8x32xf32>,
    %c0_45 = arith.constant 0 : index
    %c32 = arith.constant 32 : index
    %92 = vector.load %arg9[%c0_45, %c32] : memref<8x128xf32, #tpu.memory_space<vmem>>, vector<8x16xf32>
    tpu.vector_store %arg9[%c0_45, %c32], %46 {strides = array<i32>} : memref<8x128xf32, #tpu.memory_space<vmem>>, vector<8x16xf32>,
    %c0_46 = arith.constant 0 : index
    %c48 = arith.constant 48 : index
    %93 = vector.load %arg9[%c0_46, %c48] : memref<8x128xf32, #tpu.memory_space<vmem>>, vector<8x16xf32>
    tpu.vector_store %arg9[%c0_46, %c48], %47 {strides = array<i32>} : memref<8x128xf32, #tpu.memory_space<vmem>>, vector<8x16xf32>,
    return
  }
  func.func @transform_0(%arg0: i32) -> i32 {
    %c0_i32 = arith.constant 0 : i32
    %c0_i32_0 = arith.constant 0 : i32
    return %c0_i32 : i32
  }
  func.func @transform_1(%arg0: i32) -> (i32, i32) {
    %c0_i32 = arith.constant 0 : i32
    %c0_i32_0 = arith.constant 0 : i32
    return %arg0, %c0_i32 : i32, i32
  }
  func.func @transform_2(%arg0: i32) -> (i32, i32) {
    %c0_i32 = arith.constant 0 : i32
    %c0_i32_0 = arith.constant 0 : i32
    return %arg0, %c0_i32 : i32, i32
  }
  func.func @transform_3(%arg0: i32) -> (i32, i32) {
    %c0_i32 = arith.constant 0 : i32
    %c0_i32_0 = arith.constant 0 : i32
    %c0_i32_1 = arith.constant 0 : i32
    return %c0_i32, %c0_i32_0 : i32, i32
  }
  func.func @transform_4(%arg0: i32) -> (i32, i32) {
    %c0_i32 = arith.constant 0 : i32
    %c0_i32_0 = arith.constant 0 : i32
    %c0_i32_1 = arith.constant 0 : i32
    return %c0_i32, %c0_i32_0 : i32, i32
  }
  func.func @transform_5(%arg0: i32) -> (i32, i32) {
    %c0_i32 = arith.constant 0 : i32
    %c0_i32_0 = arith.constant 0 : i32
    %c0_i32_1 = arith.constant 0 : i32
    return %c0_i32, %c0_i32_0 : i32, i32
  }
  func.func @transform_6(%arg0: i32) -> (i32, i32) {
    %c0_i32 = arith.constant 0 : i32
    %c0_i32_0 = arith.constant 0 : i32
    %c0_i32_1 = arith.constant 0 : i32
    return %c0_i32, %c0_i32_0 : i32, i32
  }
  func.func @transform_7(%arg0: i32) -> (i32, i32) {
    %c0_i32 = arith.constant 0 : i32
    %c0_i32_0 = arith.constant 0 : i32
    %c0_i32_1 = arith.constant 0 : i32
    return %c0_i32, %c0_i32_0 : i32, i32
  }
  func.func @transform_8(%arg0: i32) -> (i32, i32) {
    %c0_i32 = arith.constant 0 : i32
    %c0_i32_0 = arith.constant 0 : i32
    return %arg0, %c0_i32 : i32, i32
  }
}

</mosaic_0001>

<llo_original>
// kernel: tpu_custom_call.1
$region0: #{tpu_custom_call.1}
  #allocation0 [shape = 'u32[]', space=smem, size = 0x4, offset = 0x4, fixed_abs, tag = 'smem constant byte address 0x4 - core index']
  #allocation1 [shape = 'u32[144,128]{1,0:T(1,128)}', space=vmem, size = 0x12000, scoped, tag = 'internal scratch']
  %s0 = inlined_call_operand.vmem [shape: f32[2], index: 0, kind: input, shape index: {}]
  %s1 = inlined_call_operand.vmem [shape: f32[8,32], index: 1, kind: input, shape index: {}]
  %s2 = inlined_call_operand.vmem [shape: f32[8,16], index: 2, kind: input, shape index: {}]
  %s3 = inlined_call_operand.vmem [shape: f32[32,256], index: 3, kind: input, shape index: {}]
  %s4 = inlined_call_operand.vmem [shape: f32[256,32], index: 4, kind: input, shape index: {}]
  %s5 = inlined_call_operand.vmem [shape: f32[16,256], index: 5, kind: input, shape index: {}]
  %s6 = inlined_call_operand.vmem [shape: f32[256,32], index: 6, kind: input, shape index: {}]
  %s7 = inlined_call_operand.vmem [shape: f32[8,256], index: 7, kind: input, shape index: {}]
  %s8 = inlined_call_operand.hbm [shape: f32[8,128], index: 8, kind: output, shape index: {}]
  %s9 = sld [smem:[#allocation0]]
  $region46: #{tpu_custom_call.1} parent=0
    _
  %s11 = ssub.s32 1, %s9
  %s12 = scalar_select 0, %s11, %s9
  $region1: #{tpu_custom_call.1} parent=0
    #allocation2 [shape = 'u8[512]{0}', space=smem, size = 0x200, scoped, tag = 'input window, operand 0, single buffered']
    #allocation3 [shape = 's32[1]{0}', space=sflag, size = 0x4, scoped, tag = 'scoped memory for tpu_custom_call.1']
    #allocation4 [shape = 's32[1]{0}', space=sflag, size = 0x4, scoped, tag = 'scoped memory for tpu_custom_call.1']
    #allocation5 [shape = 'u8[4096]{0}', space=vmem, size = 0x1000, scoped, tag = 'output window, operand 0, single buffered']
    %13 = vsyncpa [#allocation4], 0
    %14 = vsyncpa [#allocation3], 0
    // Predicated region
    $region2: #{tpu_custom_call.1} parent=1 // pred_check
      _
    $region3: #{tpu_custom_call.1} parent=1 // pred_check_branch
      %16 = sbr.rel (0) target = $region5
    $region4: #{tpu_custom_call.1} parent=1 // pred_region
      %s18 = ssub.s32 16, 16
      %19 = vsyncadd [#allocation4], %s18
      %s21 = sshll.u32 %s0, 4
      %s22 = int_to_ptr.vmem [resolvable:$true] %s21
      %24 = dma.vmem_to_smem %s22, 16, [#allocation2], [#allocation4]
    $region5: #{tpu_custom_call.1} parent=1 // pred_fallthru
      _
    // Predicated region
    $region6: #{tpu_custom_call.1} parent=1 // pred_check
      _
    $region7: #{tpu_custom_call.1} parent=1 // pred_check_branch
      %26 = sbr.rel (0) target = $region9
    $region8: #{tpu_custom_call.1} parent=1 // pred_region
      _
    $region9: #{tpu_custom_call.1} parent=1 // pred_fallthru
      _
    // Predicated region
    $region10: #{tpu_custom_call.1} parent=1 // pred_check
      _
    $region11: #{tpu_custom_call.1} parent=1 // pred_check_branch
      %28 = sbr.rel (0) target = $region13
    $region12: #{tpu_custom_call.1} parent=1 // pred_region
      _
    $region13: #{tpu_custom_call.1} parent=1 // pred_fallthru
      _
    // Predicated region
    $region14: #{tpu_custom_call.1} parent=1 // pred_check
      _
    $region15: #{tpu_custom_call.1} parent=1 // pred_check_branch
      %30 = sbr.rel (0) target = $region17
    $region16: #{tpu_custom_call.1} parent=1 // pred_region
      _
    $region17: #{tpu_custom_call.1} parent=1 // pred_fallthru
      _
    // Predicated region
    $region18: #{tpu_custom_call.1} parent=1 // pred_check
      _
    $region19: #{tpu_custom_call.1} parent=1 // pred_check_branch
      %32 = sbr.rel (0) target = $region21
    $region20: #{tpu_custom_call.1} parent=1 // pred_region
      _
    $region21: #{tpu_custom_call.1} parent=1 // pred_fallthru
      _
    // Predicated region
    $region22: #{tpu_custom_call.1} parent=1 // pred_check
      _
    $region23: #{tpu_custom_call.1} parent=1 // pred_check_branch
      %34 = sbr.rel (0) target = $region25
    $region24: #{tpu_custom_call.1} parent=1 // pred_region
      _
    $region25: #{tpu_custom_call.1} parent=1 // pred_fallthru
      _
    // Predicated region
    $region26: #{tpu_custom_call.1} parent=1 // pred_check
      _
    $region27: #{tpu_custom_call.1} parent=1 // pred_check_branch
      %36 = sbr.rel (0) target = $region29
    $region28: #{tpu_custom_call.1} parent=1 // pred_region
      _
    $region29: #{tpu_custom_call.1} parent=1 // pred_fallthru
      _
    // Predicated region
    $region30: #{tpu_custom_call.1} parent=1 // pred_check
      _
    $region31: #{tpu_custom_call.1} parent=1 // pred_check_branch
      %38 = sbr.rel (0) target = $region33
    $region32: #{tpu_custom_call.1} parent=1 // pred_region
      _
    $region33: #{tpu_custom_call.1} parent=1 // pred_fallthru
      _
    // Predicated region
    $region34: #{tpu_custom_call.1} parent=1 // pred_check
      _
    $region35: #{tpu_custom_call.1} parent=1 // pred_check_branch
      %40 = sbr.rel (0) target = $region37
    $region36: #{tpu_custom_call.1} parent=1 // pred_region
      %41 = dma.done [#allocation4], 16
    $region37: #{tpu_custom_call.1} parent=1 // pred_fallthru
      _
    %42 = sfence
    %v43 = vld [vmem:[%s7] ss:$8 sm:$0x3]
    %s44 = scalar_lea.vmem %s7, 1
    %v45 = vld [vmem:[%s44] ss:$8 sm:$0x3]
    %s46 = scalar_lea.vmem %s7, 2
    %v47 = vld [vmem:[%s46] ss:$8 sm:$0x3]
    %s48 = scalar_lea.vmem %s7, 3
    %v49 = vld [vmem:[%s48] ss:$8 sm:$0x3]
    %s50 = scalar_lea.vmem %s7, 4
    %v51 = vld [vmem:[%s50] ss:$8 sm:$0x3]
    %s52 = scalar_lea.vmem %s7, 5
    %v53 = vld [vmem:[%s52] ss:$8 sm:$0x3]
    %v54 = vld [vmem:[%s7 + $0x6] ss:$0 sm:$0xff]
    %v55 = vld [vmem:[%s7 + $0x7] ss:$0 sm:$0xff]
    %s56 = sld [smem:[#allocation2]]
    %s57 = sld [smem:[#allocation2 + $0x1]]
    %v58 = vld [vmem:[%s1] sm:$0xff]
    %v59 = vld [vmem:[%s3] sm:$0xff]
    %v60 = vld [vmem:[%s3 + $0x8] sm:$0xff]
    %v61 = vld [vmem:[%s3 + $0x10] sm:$0xff]
    %v62 = vld [vmem:[%s3 + $0x18] sm:$0xff]
    %v63 = vld [vmem:[%s3 + $0x20] sm:$0xff]
    %v64 = vld [vmem:[%s3 + $0x28] sm:$0xff]
    %v65 = vld [vmem:[%s3 + $0x30] sm:$0xff]
    %v66 = vld [vmem:[%s3 + $0x38] sm:$0xff]
    %v68 = vlaneseq
    %v69 = vshrl.u32 %v68, 7
    %v70 = vsub.s32 0, %v69
    %v71 = vrot.slane %v43, %v70
    %v72 = vlaneseq
    %v73 = vshrl.u32 %v72, 7
    %v74 = vsub.s32 1, %v73
    %v75 = vrot.slane %v43, %v74
    %vm78 = vcmask 261120
    %v80 = vsel %vm78, %v58, 0
    %82 = vmatprep.subr.mxu0 %v60
    %83 = vmatpush1.msra.mxu0 %v59
    %84 = vmatprep.subr.mxu0 %v62
    %85 = vmatpush1.msra.mxu0 %v61
    %86 = vmatprep.subr.mxu0 %v64
    %87 = vmatpush1.msra.mxu0 %v63
    %88 = vmatprep.subr.mxu0 %v66
    %89 = vmatpush1.msra.mxu0 %v65
    %90 = vmatprep.subr.mxu0 0.0
    %91 = vmatpush1.msra.mxu0 0.0
    %92 = vmatprep.subr.mxu0 0.0
    %93 = vmatpush1.msra.mxu0 0.0
    %94 = vmatprep.subr.mxu0 0.0
    %95 = vmatpush1.msra.mxu0 0.0
    %96 = vmatprep.subr.mxu0 0.0
    %97 = vmatpush1.msra.mxu0 0.0
    %98 = vmatprep.subr.mxu0 0.0
    %99 = vmatpush1.msra.mxu0 0.0
    %100 = vmatprep.subr.mxu0 0.0
    %101 = vmatpush1.msra.mxu0 0.0
    %102 = vmatprep.subr.mxu0 0.0
    %103 = vmatpush1.msra.mxu0 0.0
    %104 = vmatprep.subr.mxu0 0.0
    %105 = vmatpush1.msra.mxu0 0.0
    %106 = vmatprep.subr.mxu0 0.0
    %107 = vmatpush1.msra.mxu0 0.0
    %108 = vmatprep.subr.mxu0 0.0
    %109 = vmatpush1.msra.mxu0 0.0
    %110 = vmatprep.subr.mxu0 0.0
    %111 = vmatpush1.msra.mxu0 0.0
    %112 = vmatprep.subr.mxu0 0.0
    %113 = vmatpush1.msra.mxu0 0.0
    %114 = vmatprep.subr.mxu0 0.0
    %115 = vmatpush1.msra.mxu0 0.0
    %116 = vmatprep.subr.mxu0 0.0
    %117 = vmatpush1.msra.mxu0 0.0
    %118 = vmatprep.subr.mxu0 0.0
    %119 = vmatpush1.msra.mxu0 0.0
    %120 = vmatprep.subr.mxu0 0.0
    %121 = vmatpush1.msra.mxu0 0.0
    %122 = vmatprep.subr.mxu0 0.0
    %123 = vmatpush1.msra.mxu0 0.0
    %124 = vmatprep.subr.mxu0 0.0
    %125 = vmatpush1.msra.mxu0 0.0
    %126 = vmatprep.subr.mxu0 0.0
    %127 = vmatpush1.msra.mxu0 0.0
    %128 = vmatprep.subr.mxu0 0.0
    %129 = vmatpush1.msra.mxu0 0.0
    %130 = vmatprep.subr.mxu0 0.0
    %131 = vmatpush1.msra.mxu0 0.0
    %132 = vmatprep.subr.mxu0 0.0
    %133 = vmatpush1.msra.mxu0 0.0
    %134 = vmatprep.subr.mxu0 0.0
    %135 = vmatpush1.msra.mxu0 0.0
    %136 = vmatprep.subr.mxu0 0.0
    %137 = vmatpush1.msra.mxu0 0.0
    %138 = vmatprep.subr.mxu0 0.0
    %139 = vmatpush1.msra.mxu0 0.0
    %140 = vmatprep.subr.mxu0 0.0
    %141 = vmatpush1.msra.mxu0 0.0
    %142 = vmatprep.subr.mxu0 0.0
    %143 = vmatpush1.msra.mxu0 0.0
    %144 = vmatprep.subr.mxu0 0.0
    %145 = vmatpush1.msra.mxu0 0.0
    %146 = vmatprep.mubr.f32.mxu0 0.0
    %147 = vmatmul.mubr.f32.gmra.mrb[0].mxu0 %v80
    %v148 = vpop.f32.mrb[0].mxu0
    %v149 = vadd.f32 %v71, %v148
    %v150 = vpop.f32.mrb[0].mxu0
    %v151 = vadd.f32 %v75, %v150
    %152 = vdwg.mxu0
    %v153 = vmax.f32 %v149, 0.0
    %v154 = vmax.f32 %v151, 0.0
    %v155 = vmin.f32 %v149, 0.0
    %v156 = vmin.f32 %v151, 0.0
    %v157 = vstv %s56
    %v158 = vmul.f32 %v157, %v155
    %v159 = vmul.f32 %v157, %v156
    %v160 = vadd.f32 %v153, %v158
    %v161 = vadd.f32 %v154, %v159
    %v162 = vadd.f32 %v160, %v161
    %163 = vadd.xlane.f32.xlu0 %v162
    %v164 = vpop.xlane.xlu0 %163
    %v165 = vrcp.pop 256.0
    %v166 = vmul.f32 %v164, %v165
    %v167 = vsub.f32 %v160, %v166
    %v168 = vsub.f32 %v161, %v166
    %v169 = vmul.f32 %v167, %v167
    %v170 = vmul.f32 %v168, %v168
    %v171 = vadd.f32 %v169, %v170
    %172 = vadd.xlane.f32.xlu0 %v171
    %v173 = vpop.xlane.xlu0 %172
    %v174 = vmul.f32 %v173, %v165
    %v175 = vadd.f32 %v174, 1e-12
    %v176 = vrsqrt.pop %v175
    %v177 = vmul.f32 %v167, %v176
    %v178 = vmul.f32 %v168, %v176
    %v180 = vlaneseq
    %v181 = vshrl.u32 %v180, 7
    %v182 = vsub.s32 0, %v181
    %v183 = vrot.slane %v45, %v182
    %v184 = vlaneseq
    %v185 = vshrl.u32 %v184, 7
    %v186 = vsub.s32 1, %v185
    %v187 = vrot.slane %v45, %v186
    %v190 = vmul.f32 %v177, %v183
    %v191 = vmul.f32 %v178, %v187
    %v193 = vlaneseq
    %v194 = vshrl.u32 %v193, 7
    %v195 = vsub.s32 0, %v194
    %v196 = vrot.slane %v47, %v195
    %v197 = vlaneseq
    %v198 = vshrl.u32 %v197, 7
    %v199 = vsub.s32 1, %v198
    %v200 = vrot.slane %v47, %v199
    %v203 = vadd.f32 %v190, %v196
    %v204 = vadd.f32 %v191, %v200
    %v205 = vld [vmem:[%s4] sm:$0xff]
    %v206 = vld [vmem:[%s4 + $0x8] sm:$0xff]
    %v207 = vld [vmem:[%s4 + $0x10] sm:$0xff]
    %v208 = vld [vmem:[%s4 + $0x18] sm:$0xff]
    %v209 = vld [vmem:[%s4 + $0x20] sm:$0xff]
    %v210 = vld [vmem:[%s4 + $0x28] sm:$0xff]
    %v211 = vld [vmem:[%s4 + $0x30] sm:$0xff]
    %v212 = vld [vmem:[%s4 + $0x38] sm:$0xff]
    %v213 = vld [vmem:[%s4 + $0x40] sm:$0xff]
    %v214 = vld [vmem:[%s4 + $0x48] sm:$0xff]
    %v215 = vld [vmem:[%s4 + $0x50] sm:$0xff]
    %v216 = vld [vmem:[%s4 + $0x58] sm:$0xff]
    %v217 = vld [vmem:[%s4 + $0x60] sm:$0xff]
    %v218 = vld [vmem:[%s4 + $0x68] sm:$0xff]
    %v219 = vld [vmem:[%s4 + $0x70] sm:$0xff]
    %v220 = vld [vmem:[%s4 + $0x78] sm:$0xff]
    %v221 = vld [vmem:[%s4 + $0x80] sm:$0xff]
    %v222 = vld [vmem:[%s4 + $0x88] sm:$0xff]
    %v223 = vld [vmem:[%s4 + $0x90] sm:$0xff]
    %v224 = vld [vmem:[%s4 + $0x98] sm:$0xff]
    %v225 = vld [vmem:[%s4 + $0xa0] sm:$0xff]
    %v226 = vld [vmem:[%s4 + $0xa8] sm:$0xff]
    %v227 = vld [vmem:[%s4 + $0xb0] sm:$0xff]
    %v228 = vld [vmem:[%s4 + $0xb8] sm:$0xff]
    %v229 = vld [vmem:[%s4 + $0xc0] sm:$0xff]
    %v230 = vld [vmem:[%s4 + $0xc8] sm:$0xff]
    %v231 = vld [vmem:[%s4 + $0xd0] sm:$0xff]
    %v232 = vld [vmem:[%s4 + $0xd8] sm:$0xff]
    %v233 = vld [vmem:[%s4 + $0xe0] sm:$0xff]
    %v234 = vld [vmem:[%s4 + $0xe8] sm:$0xff]
    %v235 = vld [vmem:[%s4 + $0xf0] sm:$0xff]
    %v236 = vld [vmem:[%s4 + $0xf8] sm:$0xff]
    %237 = vmatprep.subr.mxu0 0.0
    %238 = vmatpush1.msra.mxu0 %v205
    %239 = vmatprep.subr.mxu0 0.0
    %240 = vmatpush1.msra.mxu0 %v206
    %241 = vmatprep.subr.mxu0 0.0
    %242 = vmatpush1.msra.mxu0 %v207
    %243 = vmatprep.subr.mxu0 0.0
    %244 = vmatpush1.msra.mxu0 %v208
    %245 = vmatprep.subr.mxu0 0.0
    %246 = vmatpush1.msra.mxu0 %v209
    %247 = vmatprep.subr.mxu0 0.0
    %248 = vmatpush1.msra.mxu0 %v210
    %249 = vmatprep.subr.mxu0 0.0
    %250 = vmatpush1.msra.mxu0 %v211
    %251 = vmatprep.subr.mxu0 0.0
    %252 = vmatpush1.msra.mxu0 %v212
    %253 = vmatprep.subr.mxu0 0.0
    %254 = vmatpush1.msra.mxu0 %v213
    %255 = vmatprep.subr.mxu0 0.0
    %256 = vmatpush1.msra.mxu0 %v214
    %257 = vmatprep.subr.mxu0 0.0
    %258 = vmatpush1.msra.mxu0 %v215
    %259 = vmatprep.subr.mxu0 0.0
    %260 = vmatpush1.msra.mxu0 %v216
    %261 = vmatprep.subr.mxu0 0.0
    %262 = vmatpush1.msra.mxu0 %v217
    %263 = vmatprep.subr.mxu0 0.0
    %264 = vmatpush1.msra.mxu0 %v218
    %265 = vmatprep.subr.mxu0 0.0
    %266 = vmatpush1.msra.mxu0 %v219
    %267 = vmatprep.subr.mxu0 0.0
    %268 = vmatpush1.msra.mxu0 %v220
    %269 = vmatprep.subr.mxu0 0.0
    %270 = vmatpush1.msra.mxu0 %v221
    %271 = vmatprep.subr.mxu0 0.0
    %272 = vmatpush1.msra.mxu0 %v222
    %273 = vmatprep.subr.mxu0 0.0
    %274 = vmatpush1.msra.mxu0 %v223
    %275 = vmatprep.subr.mxu0 0.0
    %276 = vmatpush1.msra.mxu0 %v224
    %277 = vmatprep.subr.mxu0 0.0
    %278 = vmatpush1.msra.mxu0 %v225
    %279 = vmatprep.subr.mxu0 0.0
    %280 = vmatpush1.msra.mxu0 %v226
    %281 = vmatprep.subr.mxu0 0.0
    %282 = vmatpush1.msra.mxu0 %v227
    %283 = vmatprep.subr.mxu0 0.0
    %284 = vmatpush1.msra.mxu0 %v228
    %285 = vmatprep.subr.mxu0 0.0
    %286 = vmatpush1.msra.mxu0 %v229
    %287 = vmatprep.subr.mxu0 0.0
    %288 = vmatpush1.msra.mxu0 %v230
    %289 = vmatprep.subr.mxu0 0.0
    %290 = vmatpush1.msra.mxu0 %v231
    %291 = vmatprep.subr.mxu0 0.0
    %292 = vmatpush1.msra.mxu0 %v232
    %293 = vmatprep.subr.mxu0 0.0
    %294 = vmatpush1.msra.mxu0 %v233
    %295 = vmatprep.subr.mxu0 0.0
    %296 = vmatpush1.msra.mxu0 %v234
    %297 = vmatprep.subr.mxu0 0.0
    %298 = vmatpush1.msra.mxu0 %v235
    %299 = vmatprep.subr.mxu0 0.0
    %300 = vmatpush1.msra.mxu0 %v236
    %301 = vmatprep.mubr.f32.mxu0 %v204
    %302 = vmatmul.mubr.f32.gmra.mrb[0].mxu0 %v203
    %v303 = vpop.f32.mrb[0].mxu0
    %v304 = vadd.f32 %v54, %v303
    %v305 = vpop.f32.mrb[0].mxu0
    %306 = vdwg.mxu0
    %v307 = vld [vmem:[%s2] sm:$0xff]
    %v308 = vmul.f32 %v304, 0.5
    %v309 = vmul.f32 %v308, 1.442695
    %v310 = vpow.pop %v309
    %312 = vrot.lane.b32.xlu0 %v310, 112
    %v313 = vpop.permute.xlu0 %312
    %v315 = vmul.f32 %v307, %v313
    %v316 = vadd.f32 %v304, %v315
    %v317 = vld [vmem:[%s5] sm:$0xff]
    %v318 = vld [vmem:[%s5 + $0x8] sm:$0xff]
    %v319 = vld [vmem:[%s5 + $0x10] sm:$0xff]
    %v320 = vld [vmem:[%s5 + $0x18] sm:$0xff]
    %v322 = vlaneseq
    %v323 = vshrl.u32 %v322, 7
    %v324 = vsub.s32 0, %v323
    %v325 = vrot.slane %v49, %v324
    %v326 = vlaneseq
    %v327 = vshrl.u32 %v326, 7
    %v328 = vsub.s32 1, %v327
    %v329 = vrot.slane %v49, %v328
    %vm332 = vcmask 130048
    %v334 = vsel %vm332, %v316, 0
    %336 = vmatprep.subr.mxu0 %v318
    %337 = vmatpush1.msra.mxu0 %v317
    %338 = vmatprep.subr.mxu0 %v320
    %339 = vmatpush1.msra.mxu0 %v319
    %340 = vmatprep.subr.mxu0 0.0
    %341 = vmatpush1.msra.mxu0 0.0
    %342 = vmatprep.subr.mxu0 0.0
    %343 = vmatpush1.msra.mxu0 0.0
    %344 = vmatprep.subr.mxu0 0.0
    %345 = vmatpush1.msra.mxu0 0.0
    %346 = vmatprep.subr.mxu0 0.0
    %347 = vmatpush1.msra.mxu0 0.0
    %348 = vmatprep.subr.mxu0 0.0
    %349 = vmatpush1.msra.mxu0 0.0
    %350 = vmatprep.subr.mxu0 0.0
    %351 = vmatpush1.msra.mxu0 0.0
    %352 = vmatprep.subr.mxu0 0.0
    %353 = vmatpush1.msra.mxu0 0.0
    %354 = vmatprep.subr.mxu0 0.0
    %355 = vmatpush1.msra.mxu0 0.0
    %356 = vmatprep.subr.mxu0 0.0
    %357 = vmatpush1.msra.mxu0 0.0
    %358 = vmatprep.subr.mxu0 0.0
    %359 = vmatpush1.msra.mxu0 0.0
    %360 = vmatprep.subr.mxu0 0.0
    %361 = vmatpush1.msra.mxu0 0.0
    %362 = vmatprep.subr.mxu0 0.0
    %363 = vmatpush1.msra.mxu0 0.0
    %364 = vmatprep.subr.mxu0 0.0
    %365 = vmatpush1.msra.mxu0 0.0
    %366 = vmatprep.subr.mxu0 0.0
    %367 = vmatpush1.msra.mxu0 0.0
    %368 = vmatprep.subr.mxu0 0.0
    %369 = vmatpush1.msra.mxu0 0.0
    %370 = vmatprep.subr.mxu0 0.0
    %371 = vmatpush1.msra.mxu0 0.0
    %372 = vmatprep.subr.mxu0 0.0
    %373 = vmatpush1.msra.mxu0 0.0
    %374 = vmatprep.subr.mxu0 0.0
    %375 = vmatpush1.msra.mxu0 0.0
    %376 = vmatprep.subr.mxu0 0.0
    %377 = vmatpush1.msra.mxu0 0.0
    %378 = vmatprep.subr.mxu0 0.0
    %379 = vmatpush1.msra.mxu0 0.0
    %380 = vmatprep.subr.mxu0 0.0
    %381 = vmatpush1.msra.mxu0 0.0
    %382 = vmatprep.subr.mxu0 0.0
    %383 = vmatpush1.msra.mxu0 0.0
    %384 = vmatprep.subr.mxu0 0.0
    %385 = vmatpush1.msra.mxu0 0.0
    %386 = vmatprep.subr.mxu0 0.0
    %387 = vmatpush1.msra.mxu0 0.0
    %388 = vmatprep.subr.mxu0 0.0
    %389 = vmatpush1.msra.mxu0 0.0
    %390 = vmatprep.subr.mxu0 0.0
    %391 = vmatpush1.msra.mxu0 0.0
    %392 = vmatprep.subr.mxu0 0.0
    %393 = vmatpush1.msra.mxu0 0.0
    %394 = vmatprep.subr.mxu0 0.0
    %395 = vmatpush1.msra.mxu0 0.0
    %396 = vmatprep.subr.mxu0 0.0
    %397 = vmatpush1.msra.mxu0 0.0
    %398 = vmatprep.subr.mxu0 0.0
    %399 = vmatpush1.msra.mxu0 0.0
    %400 = vmatprep.mubr.f32.mxu0 0.0
    %401 = vmatmul.mubr.f32.gmra.mrb[0].mxu0 %v334
    %v402 = vpop.f32.mrb[0].mxu0
    %v403 = vadd.f32 %v325, %v402
    %v404 = vpop.f32.mrb[0].mxu0
    %v405 = vadd.f32 %v329, %v404
    %406 = vdwg.mxu0
    %v407 = vmax.f32 %v403, 0.0
    %v408 = vmax.f32 %v405, 0.0
    %v409 = vmin.f32 %v403, 0.0
    %v410 = vmin.f32 %v405, 0.0
    %v411 = vstv %s57
    %v412 = vmul.f32 %v411, %v409
    %v413 = vmul.f32 %v411, %v410
    %v414 = vadd.f32 %v407, %v412
    %v415 = vadd.f32 %v408, %v413
    %v416 = vadd.f32 %v414, %v415
    %417 = vadd.xlane.f32.xlu0 %v416
    %v418 = vpop.xlane.xlu0 %417
    %v419 = vmul.f32 %v418, %v165
    %v420 = vsub.f32 %v414, %v419
    %v421 = vsub.f32 %v415, %v419
    %v422 = vmul.f32 %v420, %v420
    %v423 = vmul.f32 %v421, %v421
    %v424 = vadd.f32 %v422, %v423
    %425 = vadd.xlane.f32.xlu0 %v424
    %v426 = vpop.xlane.xlu0 %425
    %v427 = vmul.f32 %v426, %v165
    %v428 = vadd.f32 %v427, 1e-12
    %v429 = vrsqrt.pop %v428
    %v430 = vmul.f32 %v420, %v429
    %v431 = vmul.f32 %v421, %v429
    %v433 = vlaneseq
    %v434 = vshrl.u32 %v433, 7
    %v435 = vsub.s32 0, %v434
    %v436 = vrot.slane %v51, %v435
    %v437 = vlaneseq
    %v438 = vshrl.u32 %v437, 7
    %v439 = vsub.s32 1, %v438
    %v440 = vrot.slane %v51, %v439
    %v443 = vmul.f32 %v430, %v436
    %v444 = vmul.f32 %v431, %v440
    %v446 = vlaneseq
    %v447 = vshrl.u32 %v446, 7
    %v448 = vsub.s32 0, %v447
    %v449 = vrot.slane %v53, %v448
    %v450 = vlaneseq
    %v451 = vshrl.u32 %v450, 7
    %v452 = vsub.s32 1, %v451
    %v453 = vrot.slane %v53, %v452
    %v456 = vadd.f32 %v443, %v449
    %v457 = vadd.f32 %v444, %v453
    %v458 = vld [vmem:[%s6] sm:$0xff]
    %v459 = vld [vmem:[%s6 + $0x8] sm:$0xff]
    %v460 = vld [vmem:[%s6 + $0x10] sm:$0xff]
    %v461 = vld [vmem:[%s6 + $0x18] sm:$0xff]
    %v462 = vld [vmem:[%s6 + $0x20] sm:$0xff]
    %v463 = vld [vmem:[%s6 + $0x28] sm:$0xff]
    %v464 = vld [vmem:[%s6 + $0x30] sm:$0xff]
    %v465 = vld [vmem:[%s6 + $0x38] sm:$0xff]
    %v466 = vld [vmem:[%s6 + $0x40] sm:$0xff]
    %v467 = vld [vmem:[%s6 + $0x48] sm:$0xff]
    %v468 = vld [vmem:[%s6 + $0x50] sm:$0xff]
    %v469 = vld [vmem:[%s6 + $0x58] sm:$0xff]
    %v470 = vld [vmem:[%s6 + $0x60] sm:$0xff]
    %v471 = vld [vmem:[%s6 + $0x68] sm:$0xff]
    %v472 = vld [vmem:[%s6 + $0x70] sm:$0xff]
    %v473 = vld [vmem:[%s6 + $0x78] sm:$0xff]
    %v474 = vld [vmem:[%s6 + $0x80] sm:$0xff]
    %v475 = vld [vmem:[%s6 + $0x88] sm:$0xff]
    %v476 = vld [vmem:[%s6 + $0x90] sm:$0xff]
    %v477 = vld [vmem:[%s6 + $0x98] sm:$0xff]
    %v478 = vld [vmem:[%s6 + $0xa0] sm:$0xff]
    %v479 = vld [vmem:[%s6 + $0xa8] sm:$0xff]
    %v480 = vld [vmem:[%s6 + $0xb0] sm:$0xff]
    %v481 = vld [vmem:[%s6 + $0xb8] sm:$0xff]
    %v482 = vld [vmem:[%s6 + $0xc0] sm:$0xff]
    %v483 = vld [vmem:[%s6 + $0xc8] sm:$0xff]
    %v484 = vld [vmem:[%s6 + $0xd0] sm:$0xff]
    %v485 = vld [vmem:[%s6 + $0xd8] sm:$0xff]
    %v486 = vld [vmem:[%s6 + $0xe0] sm:$0xff]
    %v487 = vld [vmem:[%s6 + $0xe8] sm:$0xff]
    %v488 = vld [vmem:[%s6 + $0xf0] sm:$0xff]
    %v489 = vld [vmem:[%s6 + $0xf8] sm:$0xff]
    %490 = vmatprep.subr.mxu0 0.0
    %491 = vmatpush1.msra.mxu0 %v458
    %492 = vmatprep.subr.mxu0 0.0
    %493 = vmatpush1.msra.mxu0 %v459
    %494 = vmatprep.subr.mxu0 0.0
    %495 = vmatpush1.msra.mxu0 %v460
    %496 = vmatprep.subr.mxu0 0.0
    %497 = vmatpush1.msra.mxu0 %v461
    %498 = vmatprep.subr.mxu0 0.0
    %499 = vmatpush1.msra.mxu0 %v462
    %500 = vmatprep.subr.mxu0 0.0
    %501 = vmatpush1.msra.mxu0 %v463
    %502 = vmatprep.subr.mxu0 0.0
    %503 = vmatpush1.msra.mxu0 %v464
    %504 = vmatprep.subr.mxu0 0.0
    %505 = vmatpush1.msra.mxu0 %v465
    %506 = vmatprep.subr.mxu0 0.0
    %507 = vmatpush1.msra.mxu0 %v466
    %508 = vmatprep.subr.mxu0 0.0
    %509 = vmatpush1.msra.mxu0 %v467
    %510 = vmatprep.subr.mxu0 0.0
    %511 = vmatpush1.msra.mxu0 %v468
    %512 = vmatprep.subr.mxu0 0.0
    %513 = vmatpush1.msra.mxu0 %v469
    %514 = vmatprep.subr.mxu0 0.0
    %515 = vmatpush1.msra.mxu0 %v470
    %516 = vmatprep.subr.mxu0 0.0
    %517 = vmatpush1.msra.mxu0 %v471
    %518 = vmatprep.subr.mxu0 0.0
    %519 = vmatpush1.msra.mxu0 %v472
    %520 = vmatprep.subr.mxu0 0.0
    %521 = vmatpush1.msra.mxu0 %v473
    %522 = vmatprep.subr.mxu0 0.0
    %523 = vmatpush1.msra.mxu0 %v474
    %524 = vmatprep.subr.mxu0 0.0
    %525 = vmatpush1.msra.mxu0 %v475
    %526 = vmatprep.subr.mxu0 0.0
    %527 = vmatpush1.msra.mxu0 %v476
    %528 = vmatprep.subr.mxu0 0.0
    %529 = vmatpush1.msra.mxu0 %v477
    %530 = vmatprep.subr.mxu0 0.0
    %531 = vmatpush1.msra.mxu0 %v478
    %532 = vmatprep.subr.mxu0 0.0
    %533 = vmatpush1.msra.mxu0 %v479
    %534 = vmatprep.subr.mxu0 0.0
    %535 = vmatpush1.msra.mxu0 %v480
    %536 = vmatprep.subr.mxu0 0.0
    %537 = vmatpush1.msra.mxu0 %v481
    %538 = vmatprep.subr.mxu0 0.0
    %539 = vmatpush1.msra.mxu0 %v482
    %540 = vmatprep.subr.mxu0 0.0
    %541 = vmatpush1.msra.mxu0 %v483
    %542 = vmatprep.subr.mxu0 0.0
    %543 = vmatpush1.msra.mxu0 %v484
    %544 = vmatprep.subr.mxu0 0.0
    %545 = vmatpush1.msra.mxu0 %v485
    %546 = vmatprep.subr.mxu0 0.0
    %547 = vmatpush1.msra.mxu0 %v486
    %548 = vmatprep.subr.mxu0 0.0
    %549 = vmatpush1.msra.mxu0 %v487
    %550 = vmatprep.subr.mxu0 0.0
    %551 = vmatpush1.msra.mxu0 %v488
    %552 = vmatprep.subr.mxu0 0.0
    %553 = vmatpush1.msra.mxu0 %v489
    %554 = vmatprep.mubr.f32.mxu0 %v457
    %555 = vmatmul.mubr.f32.gmra.mrb[0].mxu0 %v456
    %v556 = vpop.f32.mrb[0].mxu0
    %v557 = vadd.f32 %v55, %v556
    %v558 = vpop.f32.mrb[0].mxu0
    %559 = vdwg.mxu0
    %560 = vst [vmem:[#allocation5] sm:$0xff] 0.0
    %561 = vst.msk [vmem:[#allocation5] sm:$0xff] %vm78, %v557
    %563 = vrot.lane.b32.xlu0 %v304, 32
    %v564 = vpop.permute.xlu0 %563
    %vm566 = vcmask 392448
    %567 = vst.msk [vmem:[#allocation5] sm:$0xff] %vm566, %v564
    %vm568 = vcmask 523648
    %569 = vst.msk [vmem:[#allocation5] sm:$0xff] %vm568, %v564
    // Predicated region
    $region38: #{tpu_custom_call.1} parent=1 // pred_check
      _
    $region39: #{tpu_custom_call.1} parent=1 // pred_check_branch
      %571 = sbr.rel (0) target = $region41
    $region40: #{tpu_custom_call.1} parent=1 // pred_region
      %s573 = ssub.s32 128, 128
      %574 = vsyncadd [#allocation3], %s573
      %s576 = sshll.u32 [#allocation5], 4
      %s577 = int_to_ptr.vmem [resolvable:$true] %s576
      %579 = dma.vmem_to_hbm [thread:$0]  %s577, 128, %s8, [#allocation3]
    $region41: #{tpu_custom_call.1} parent=1 // pred_fallthru
      _
    // Predicated region
    $region42: #{tpu_custom_call.1} parent=1 // pred_check
      _
    $region43: #{tpu_custom_call.1} parent=1 // pred_check_branch
      %581 = sbr.rel (0) target = $region45
    $region44: #{tpu_custom_call.1} parent=1 // pred_region
      %582 = dma.done [#allocation3], 128
    $region45: #{tpu_custom_call.1} parent=1 // pred_fallthru
      _
    %583 = vsyncpa [#allocation3], 1
    %584 = vsyncpa [#allocation4], 1

</llo_original>
